<compile_context>
chip_gen: v7x
topology: tpu7x:2x2x1
jax: 0.10.0
libtpu: 0.0.40
codegen_flags: <defaults>
</compile_context>

<pallas_src>
import functools

import jax
import jax.numpy as jnp
from jax import lax
from jax.experimental import pallas as pl
from jax.experimental.pallas import tpu as pltpu


def _ce_kernel(x_ref, tgt_ref, out_ref, *, t_total: int):
    """One (batch, t-tile) grid step.

    x_ref  : (C, TT) logits for one batch element (class dim on sublanes)
    tgt_ref: (1, TT) int32 target class ids
    out_ref: (1, TT) f32 per-lane partial loss sums, resident across the t axis
    """
    t = pl.program_id(1)

    @pl.when(t == 0)
    def _():
        out_ref[...] = jnp.zeros_like(out_ref)

    logits = x_ref[...].astype(jnp.float32)                 # (C, TT)
    tgt = tgt_ref[...]                                       # (1, TT)
    c, tt = logits.shape

    # Numerically stable log-sum-exp over the class (sublane) axis.
    m = jnp.max(logits, axis=0, keepdims=True)               # (1, TT)
    lse = m + jnp.log(jnp.sum(jnp.exp(logits - m), axis=0, keepdims=True))

    # Gather the target logit via one-hot compare along the class axis (VPU).
    cls = lax.broadcasted_iota(jnp.int32, (c, tt), 0)        # (C, TT)
    tgt_logit = jnp.sum(jnp.where(cls == tgt, logits, 0.0),
                        axis=0, keepdims=True)               # (1, TT)

    loss = lse - tgt_logit                                   # (1, TT)

    # Mask out columns past the true sample length (ragged last tile); the
    # select also neutralizes any garbage/NaN read from block padding.
    col = lax.broadcasted_iota(jnp.int32, (1, tt), 1) + t * tt
    loss = jnp.where(col < t_total, loss, 0.0)

    out_ref[...] += loss                                     # lane-dense VPU add


def _choose_tile_t(n_classes: int, t_len: int, dtype) -> int:
    """Largest lane tile (multiple of 128) keeping the logits tile ~<=2 MiB."""
    bytes_per_col = n_classes * jnp.dtype(dtype).itemsize
    budget = 2 * 1024 * 1024                                  # per logits buffer
    cap = max(128, (budget // max(bytes_per_col, 1)) // 128 * 128)
    cap = min(cap, 8192)
    if t_len <= cap:
        return t_len                                          # full dim -> valid block
    return cap


def cross_entropy_loss(inputs, targets, *, tile_t=None):
    """inputs: (B, C, T) float logits; targets: (B, T) int class ids."""
    B, C, T = inputs.shape
    if tile_t is None:
        tile_t = _choose_tile_t(C, T, inputs.dtype)
    num_t = pl.cdiv(T, tile_t)

    # Targets are tiny: a metadata reshape to (B, 1, T) gives a lane-dense DMA.
    tgt = targets.reshape(B, 1, T).astype(jnp.int32)

    kernel = functools.partial(_ce_kernel, t_total=T)

    partials = pl.pallas_call(
        kernel,
        out_shape=jax.ShapeDtypeStruct((B, 1, tile_t), jnp.float32),
        grid_spec=pltpu.PrefetchScalarGridSpec(
            num_scalar_prefetch=0,
            grid=(B, num_t),
            in_specs=[
                # Native (B, C, T): per-step block is one batch row, all C
                # classes, tile_t samples -> (C, tile_t) in the kernel.
                pl.BlockSpec((None, C, tile_t), lambda b, t: (b, 0, t)),
                pl.BlockSpec((None, 1, tile_t), lambda b, t: (b, 0, t)),
            ],
            # Per-batch partial sums, resident across the t (reduction) axis.
            out_specs=pl.BlockSpec((None, 1, tile_t), lambda b, t: (b, 0, 0)),
        ),
        compiler_params=pltpu.CompilerParams(
            dimension_semantics=("parallel", "arbitrary"),
            vmem_limit_bytes=32 * 1024 * 1024,
        ),
    )(inputs, tgt)

    # Final mean reduction (tiny) done in the wrapper so the batch axis can be
    # sharded across TensorCores.
    return jnp.sum(partials) / jnp.float32(B * T)


def _reference(inputs, targets):
    B, C, T = inputs.shape
    logits = jnp.transpose(inputs, (0, 2, 1)).reshape(B * T, C).astype(jnp.float32)
    tgt = targets.reshape(B * T).astype(jnp.int32)
    lse = jax.nn.logsumexp(logits, axis=-1)
    tgt_logit = jnp.take_along_axis(logits, tgt[:, None], axis=-1)[:, 0]
    return jnp.mean(lse - tgt_logit)


if __name__ == "__main__":
    key = jax.random.PRNGKey(0)
    k1, k2, k3, k4 = jax.random.split(key, 4)

    # Small shapes: batch=2, num_classes (n_out_channels)=16, samples=16.
    B, C, T = 2, 16, 16
    inputs = jax.random.normal(k1, (B, C, T), dtype=jnp.float32)
    targets = jax.random.randint(k2, (B, T), 0, C, dtype=jnp.int32)

    loss = jax.block_until_ready(cross_entropy_loss(inputs, targets))
    ref = _reference(inputs, targets)
    assert jnp.allclose(loss, ref, rtol=1e-5, atol=1e-5), (loss, ref)

    # Second check: non-divisible T exercises the ragged-tail masking path.
    B2, C2, T2 = 2, 16, 200
    inputs2 = jax.random.normal(k3, (B2, C2, T2), dtype=jnp.float32)
    targets2 = jax.random.randint(k4, (B2, T2), 0, C2, dtype=jnp.int32)

    loss2 = jax.block_until_ready(cross_entropy_loss(inputs2, targets2, tile_t=128))
    ref2 = _reference(inputs2, targets2)
    assert jnp.allclose(loss2, ref2, rtol=1e-5, atol=1e-5), (loss2, ref2)

    print("KERNEL_OK")
</pallas_src>

<mosaic_0001>
module attributes {stable_mosaic.version = 11 : i64} {
  func.func @_ce_kernel(%arg0: i32, %arg1: i32, %arg2: memref<1x16x16xf32, #tpu.memory_space<vmem>>, %arg3: memref<1x1x16xi32, #tpu.memory_space<vmem>>, %arg4: memref<1x1x16xf32, #tpu.memory_space<vmem>>) attributes {dimension_semantics = [#tpu.dimension_semantics<parallel>, #tpu.dimension_semantics<arbitrary>], iteration_bounds = array<i64: 2, 1>, scalar_prefetch = 0 : i64, scratch_operands = 0 : i64, tpu.core_type = #tpu.core_type<tc>, window_params = [{transform_indices = @transform_0, window_bounds = array<i64: 1, 16, 16>}, {transform_indices = @transform_1, window_bounds = array<i64: 1, 1, 16>}, {transform_indices = @transform_2, window_bounds = array<i64: 1, 1, 16>}]} {
    %c0_i32 = arith.constant 0 : i32
    %0 = arith.cmpi eq, %arg1, %c0_i32 : i32
    %1 = arith.extui %0 : i1 to i32
    %c0_i32_0 = arith.constant 0 : i32
    %2 = arith.cmpi ne, %1, %c0_i32_0 : i32
    scf.if %2 {
      %cst_17 = arith.constant 0.000000e+00 : f32
      %38 = vector.broadcast %cst_17 : f32 to vector<1x16xf32>
      %c0_18 = arith.constant 0 : index
      %c0_19 = arith.constant 0 : index
      %c0_20 = arith.constant 0 : index
      %39 = vector.load %arg4[%c0_18, %c0_19, %c0_20] : memref<1x1x16xf32, #tpu.memory_space<vmem>>, vector<1x1x16xf32>
      %40 = vector.shape_cast %39 : vector<1x1x16xf32> to vector<1x16xf32>
      %41 = vector.shape_cast %38 : vector<1x16xf32> to vector<1x1x16xf32>
      tpu.vector_store %arg4[%c0_18, %c0_19, %c0_20], %41 {strides = array<i32>} : memref<1x1x16xf32, #tpu.memory_space<vmem>>, vector<1x1x16xf32>,
    } else {
    }
    %c0 = arith.constant 0 : index
    %c0_1 = arith.constant 0 : index
    %c0_2 = arith.constant 0 : index
    %3 = vector.load %arg2[%c0, %c0_1, %c0_2] : memref<1x16x16xf32, #tpu.memory_space<vmem>>, vector<1x16x16xf32>
    %4 = vector.shape_cast %3 : vector<1x16x16xf32> to vector<16x16xf32>
    %c0_3 = arith.constant 0 : index
    %c0_4 = arith.constant 0 : index
    %c0_5 = arith.constant 0 : index
    %5 = vector.load %arg3[%c0_3, %c0_4, %c0_5] : memref<1x1x16xi32, #tpu.memory_space<vmem>>, vector<1x1x16xi32>
    %6 = vector.shape_cast %5 : vector<1x1x16xi32> to vector<1x16xi32>
    %cst = arith.constant dense<0xFF800000> : vector<16xf32>
    %7 = vector.multi_reduction <maximumf>, %4, %cst [0] : vector<16x16xf32> to vector<16xf32>
    %8 = vector.shape_cast %7 : vector<16xf32> to vector<1x16xf32>
    %9 = vector.broadcast %8 : vector<1x16xf32> to vector<16x16xf32>
    %10 = arith.subf %4, %9 : vector<16x16xf32>
    %11 = math.exp %10 : vector<16x16xf32>
    %cst_6 = arith.constant dense<0.000000e+00> : vector<16xf32>
    %12 = vector.multi_reduction <add>, %11, %cst_6 [0] : vector<16x16xf32> to vector<16xf32>
    %13 = vector.shape_cast %12 : vector<16xf32> to vector<1x16xf32>
    %14 = math.log %13 : vector<1x16xf32>
    %15 = arith.addf %8, %14 : vector<1x16xf32>
    %16 = tpu.iota {dimensions = array<i32: 0>} : vector<16x16xi32>
    %17 = vector.broadcast %6 : vector<1x16xi32> to vector<16x16xi32>
    %18 = arith.cmpi eq, %16, %17 : vector<16x16xi32>
    %cst_7 = arith.constant 0.000000e+00 : f32
    %19 = vector.broadcast %cst_7 : f32 to vector<16x16xf32>
    %20 = arith.select %18, %4, %19 : vector<16x16xi1>, vector<16x16xf32>
    %cst_8 = arith.constant dense<0.000000e+00> : vector<16xf32>
    %21 = vector.multi_reduction <add>, %20, %cst_8 [0] : vector<16x16xf32> to vector<16xf32>
    %22 = vector.shape_cast %21 : vector<16xf32> to vector<1x16xf32>
    %23 = arith.subf %15, %22 : vector<1x16xf32>
    %24 = tpu.iota {dimensions = array<i32: 1>} : vector<1x16xi32>
    %c16_i32 = arith.constant 16 : i32
    %25 = arith.muli %arg1, %c16_i32 : i32
    %26 = vector.broadcast %25 : i32 to vector<1x16xi32>
    %27 = arith.addi %24, %26 : vector<1x16xi32>
    %c16_i32_9 = arith.constant 16 : i32
    %28 = vector.broadcast %c16_i32_9 : i32 to vector<1x16xi32>
    %29 = arith.cmpi slt, %27, %28 : vector<1x16xi32>
    %cst_10 = arith.constant 0.000000e+00 : f32
    %30 = vector.broadcast %cst_10 : f32 to vector<1x16xf32>
    %31 = arith.select %29, %23, %30 : vector<1x16xi1>, vector<1x16xf32>
    %c0_11 = arith.constant 0 : index
    %c0_12 = arith.constant 0 : index
    %c0_13 = arith.constant 0 : index
    %32 = vector.load %arg4[%c0_11, %c0_12, %c0_13] : memref<1x1x16xf32, #tpu.memory_space<vmem>>, vector<1x1x16xf32>
    %33 = vector.shape_cast %32 : vector<1x1x16xf32> to vector<1x16xf32>
    %34 = arith.addf %33, %31 : vector<1x16xf32>
    %c0_14 = arith.constant 0 : index
    %c0_15 = arith.constant 0 : index
    %c0_16 = arith.constant 0 : index
    %35 = vector.load %arg4[%c0_14, %c0_15, %c0_16] : memref<1x1x16xf32, #tpu.memory_space<vmem>>, vector<1x1x16xf32>
    %36 = vector.shape_cast %35 : vector<1x1x16xf32> to vector<1x16xf32>
    %37 = vector.shape_cast %34 : vector<1x16xf32> to vector<1x1x16xf32>
    tpu.vector_store %arg4[%c0_14, %c0_15, %c0_16], %37 {strides = array<i32>} : memref<1x1x16xf32, #tpu.memory_space<vmem>>, vector<1x1x16xf32>,
    return
  }
  func.func @transform_0(%arg0: i32, %arg1: i32) -> (i32, i32, i32) {
    %c0_i32 = arith.constant 0 : i32
    %c0_i32_0 = arith.constant 0 : i32
    return %arg0, %c0_i32, %arg1 : i32, i32, i32
  }
  func.func @transform_1(%arg0: i32, %arg1: i32) -> (i32, i32, i32) {
    %c0_i32 = arith.constant 0 : i32
    %c0_i32_0 = arith.constant 0 : i32
    return %arg0, %c0_i32, %arg1 : i32, i32, i32
  }
  func.func @transform_2(%arg0: i32, %arg1: i32) -> (i32, i32, i32) {
    %c0_i32 = arith.constant 0 : i32
    %c0_i32_0 = arith.constant 0 : i32
    %c0_i32_1 = arith.constant 0 : i32
    return %arg0, %c0_i32, %c0_i32_0 : i32, i32, i32
  }
}

</mosaic_0001>

<llo_original>
// kernel: tpu_custom_call.1
$region0: #{tpu_custom_call.1}
  #allocation0 [shape = 'u32[]', space=smem, size = 0x4, offset = 0x4, fixed_abs, tag = 'smem constant byte address 0x4 - core index']
  #allocation1 [shape = 'u32[144,128]{1,0:T(1,128)}', space=vmem, size = 0x12000, scoped, tag = 'internal scratch']
  %s0 = inlined_call_operand.hbm [shape: f32[2,16,16], index: 0, kind: input, shape index: {}]
  %s1 = inlined_call_operand.vmem [shape: s32[2,1,16], index: 1, kind: input, shape index: {}]
  %s2 = inlined_call_operand.hbm [shape: f32[2,1,16], index: 2, kind: output, shape index: {}]
  %s3 = sld [smem:[#allocation0]]
  $region49: #{tpu_custom_call.1} parent=0
    _
  %s5 = ssub.s32 1, %s3
  %s6 = scalar_select 0, %s5, %s3
  $region1: #{tpu_custom_call.1} parent=0
    #allocation2 [shape = 'u8[16384]{0}', space=vmem, size = 0x4000, scoped, tag = 'input window, operand 0']
    #allocation3 [shape = 's32[2]{0}', space=sflag, size = 0x8, scoped, tag = 'scoped memory for tpu_custom_call.1']
    #allocation4 [shape = 's32[2]{0}', space=sflag, size = 0x8, scoped, tag = 'scoped memory for tpu_custom_call.1']
    #allocation5 [shape = 'u8[1024]{0}', space=vmem, size = 0x400, scoped, tag = 'output window, operand 0']
    %7 = vsyncpa [#allocation3], 0
    %s8 = scalar_lea.sflag [#allocation3], 1
    %9 = vsyncpa %s8, 0
    %10 = vsyncpa [#allocation4], 0
    %s11 = scalar_lea.sflag [#allocation4], 1
    %12 = vsyncpa %s11, 0
    loop: start=0, step=1, limit=4
    $region2: #{tpu_custom_call.1} parent=1 // loop_pre_header
      _
    $region3: #{tpu_custom_call.1} parent=1 // loop_header
      %s14 = sphi 0, %s18
      %p15 = scmp.ge.s32.totalorder %s14, 4
      %s21 = sphi 0, %s33
      %s22 = sphi 0, %s29
      %s23 = sphi 0, %s21
      %s24 = sphi 0, %s22
      %s25 = sphi 0, %s23
      %s26 = sphi 0, %s24
      %s38 = sphi 0, %s40
      %s41 = sphi 0, %s38
      %s42 = sphi 0, %s41
      %s58 = sphi 0, %s42
      %s66 = sphi 0, %s68
      %s69 = sphi 0, %s66
      %s70 = sphi 0, %s69
      %s86 = sphi 0, %s70
      %s92 = sphi 0, %s94
      %s95 = sphi 0, %s92
      %s96 = sphi 0, %s95
      %s112 = sphi 0, %s96
    $region4: #{tpu_custom_call.1} parent=1 // loop_header_branch
      %17 = sbr.rel (%p15) target = $region8
    $region5: #{tpu_custom_call.1} parent=1 // loop_body
      %s19 = ssub.s32 %s14, 1
      %s20 = ssub.s32 %s14, 2
      %s27 = sadd.s32 1, %s22
      %p28 = scmp.ge.s32.totalorder %s27, 1
      %s29 = scalar_select %p28, 0, %s27
      %s30 = sadd.s32 1, %s21
      %s31 = scalar_select %p28, %s30, %s21
      %p32 = scmp.ge.s32.totalorder %s31, 2
      %s33 = scalar_select %p32, 0, %s31
      %s34 = ssub.s32 %s21, %s33
      %s35 = ssub.s32 %s22, %s29
      %s36 = sor.u32 %s34, %s35
      %p37 = scmp.eq.s32.totalorder %s36, 0
      %s39 = sadd.s32 %s38, 1
      %s40 = scalar_select %p37, %s38, %s39
      %p43 = pneg %p37
      %p44 = scmp.eq.s32.totalorder %s14, 1
      %p45 = por %p43, %p44
      %p46 = scmp.ne.s32.totalorder %s38, %s41
      %p47 = scmp.eq.s32.totalorder %s14, 0
      %p48 = por %p46, %p47
      %p49 = scmp.ne.s32.totalorder %s38, %s41
      %p50 = scmp.eq.s32.totalorder %s19, 1
      %p51 = por %p49, %p50
      %p52 = scmp.ne.s32.totalorder %s41, %s42
      %p53 = scmp.eq.s32.totalorder %s19, 0
      %p54 = por %p52, %p53
      %p55 = scmp.ne.s32.totalorder %s41, %s42
      %p56 = scmp.eq.s32.totalorder %s20, 1
      %p57 = por %p55, %p56
      %p59 = scmp.ne.s32.totalorder %s42, %s58
      %p60 = scmp.eq.s32.totalorder %s20, 0
      %p61 = por %p59, %p60
      %s62 = ssub.s32 %s21, %s33
      %s63 = ssub.s32 %s22, %s29
      %s64 = sor.u32 %s62, %s63
      %p65 = scmp.eq.s32.totalorder %s64, 0
      %s67 = sadd.s32 %s66, 1
      %s68 = scalar_select %p65, %s66, %s67
      %p71 = pneg %p65
      %p72 = scmp.eq.s32.totalorder %s14, 1
      %p73 = por %p71, %p72
      %p74 = scmp.ne.s32.totalorder %s66, %s69
      %p75 = scmp.eq.s32.totalorder %s14, 0
      %p76 = por %p74, %p75
      %p77 = scmp.ne.s32.totalorder %s66, %s69
      %p78 = scmp.eq.s32.totalorder %s19, 1
      %p79 = por %p77, %p78
      %p80 = scmp.ne.s32.totalorder %s69, %s70
      %p81 = scmp.eq.s32.totalorder %s19, 0
      %p82 = por %p80, %p81
      %p83 = scmp.ne.s32.totalorder %s69, %s70
      %p84 = scmp.eq.s32.totalorder %s20, 1
      %p85 = por %p83, %p84
      %p87 = scmp.ne.s32.totalorder %s70, %s86
      %p88 = scmp.eq.s32.totalorder %s20, 0
      %p89 = por %p87, %p88
      %s90 = ssub.s32 %s21, %s33
      %p91 = scmp.eq.s32.totalorder %s90, 0
      %s93 = sadd.s32 %s92, 1
      %s94 = scalar_select %p91, %s92, %s93
      %p97 = pneg %p91
      %p98 = scmp.eq.s32.totalorder %s14, 1
      %p99 = por %p97, %p98
      %p100 = scmp.ne.s32.totalorder %s92, %s95
      %p101 = scmp.eq.s32.totalorder %s14, 0
      %p102 = por %p100, %p101
      %p103 = scmp.ne.s32.totalorder %s92, %s95
      %p104 = scmp.eq.s32.totalorder %s19, 1
      %p105 = por %p103, %p104
      %p106 = scmp.ne.s32.totalorder %s95, %s96
      %p107 = scmp.eq.s32.totalorder %s19, 0
      %p108 = por %p106, %p107
      %p109 = scmp.ne.s32.totalorder %s95, %s96
      %p110 = scmp.eq.s32.totalorder %s20, 1
      %p111 = por %p109, %p110
      %p113 = scmp.ne.s32.totalorder %s96, %s112
      %p114 = scmp.eq.s32.totalorder %s20, 0
      %p115 = por %p113, %p114
      %p116 = scmp.le.s32.totalorder 1, %s14
      %p117 = scmp.lt.s32.totalorder %s14, 3
      %p118 = pnand %p116, %p117
      %p119 = pneg %p118
      // Predicated region
      $region9: #{tpu_custom_call.1} parent=5 // pred_check
        _
      $region10: #{tpu_custom_call.1} parent=5 // pred_check_branch
        %121 = sbr.rel (%p118) target = $region12
      $region11: #{tpu_custom_call.1} parent=5 // pred_region
        %s122 = ssub.s32 %s14, 1
      $region12: #{tpu_custom_call.1} parent=5 // pred_fallthru
        _
      %p123 = scmp.lt.s32.totalorder %s14, 2
      // Predicated region
      $region13: #{tpu_custom_call.1} parent=5 // pred_check
        %p124 = pneg %p123
      $region14: #{tpu_custom_call.1} parent=5 // pred_check_branch
        %126 = sbr.rel (%p124) target = $region16
      $region15: #{tpu_custom_call.1} parent=5 // pred_region
        // Predicated region
        $region17: #{tpu_custom_call.1} parent=15 // pred_check
          %p127 = pneg %p48
        $region18: #{tpu_custom_call.1} parent=15 // pred_check_branch
          %129 = sbr.rel (%p127) target = $region20
        $region19: #{tpu_custom_call.1} parent=15 // pred_region
          %s130 = sand.u32 %s38, 1
          %s131 = scalar_lea.sflag [#allocation3], %s130
          %s132 = sand.u32 %s38, 1
          %s133 = smul.addr %s132, 16
          %s134 = scalar_lea.vmem [#allocation2], %s133
          %s136 = ssub.s32 256, 256
          %137 = vsyncadd %s131, %s136
          %s138 = smul.addr %s21, 2
          %s139 = sadd.s32 %s22, %s138
          %s140 = smul.addr %s139, 128
          %s141 = scalar_lea.hbm %s0, %s140
          %s142 = sshll.u32 %s134, 4
          %s143 = int_to_ptr.vmem [resolvable:$true] %s142
          %148 = dma.hbm_to_vmem [thread:$0]  %s141, 256, %s143, %s131, 128, 128, 8
        $region20: #{tpu_custom_call.1} parent=15 // pred_fallthru
          _
        // Predicated region
        $region21: #{tpu_custom_call.1} parent=15 // pred_check
          %p149 = pneg %p76
        $region22: #{tpu_custom_call.1} parent=15 // pred_check_branch
          %151 = sbr.rel (%p149) target = $region24
        $region23: #{tpu_custom_call.1} parent=15 // pred_region
          %p152 = scmp.lt.s32.totalorder %s21, 1
          %s153 = scalar_select %p152, %s21, 1
          %p154 = scmp.lt.s32.totalorder %s22, 0
          %s155 = scalar_select %p154, %s22, 0
          %s156 = sadd.s32 %s155, %s153
          %s157 = scalar_lea.vmem %s1, %s156
        $region24: #{tpu_custom_call.1} parent=15 // pred_fallthru
          _
      $region16: #{tpu_custom_call.1} parent=5 // pred_fallthru
        _
      %p158 = scmp.le.s32.totalorder 1, %s14
      %p159 = scmp.lt.s32.totalorder %s14, 3
      %p160 = pnand %p158, %p159
      %p161 = pneg %p160
      // Predicated region
      $region25: #{tpu_custom_call.1} parent=5 // pred_check
        _
      $region26: #{tpu_custom_call.1} parent=5 // pred_check_branch
        %163 = sbr.rel (%p160) target = $region28
      $region27: #{tpu_custom_call.1} parent=5 // pred_region
        %s164 = ssub.s32 %s14, 1
        %s165 = sand.u32 %s41, 1
        %s166 = scalar_lea.sflag [#allocation3], %s165
        %s167 = sand.u32 %s41, 1
        %s168 = smul.addr %s167, 16
        %s169 = scalar_lea.vmem [#allocation2], %s168
        // Predicated region
        $region29: #{tpu_custom_call.1} parent=27 // pred_check
          %p170 = pneg %p54
        $region30: #{tpu_custom_call.1} parent=27 // pred_check_branch
          %172 = sbr.rel (%p170) target = $region32
        $region31: #{tpu_custom_call.1} parent=27 // pred_region
          %173 = dma.done %s166, 256
        $region32: #{tpu_custom_call.1} parent=27 // pred_fallthru
          _
        %s174 = sand.u32 %s41, 1
        %s175 = scalar_lea.sflag [#allocation3], %s174
        %s176 = sand.u32 %s41, 1
        %s177 = smul.addr %s176, 16
        %s178 = scalar_lea.vmem [#allocation2], %s177
        %p179 = pneg %p54
        %p180 = pneg %p51
        %p181 = scmp.lt.s32.totalorder %s23, 1
        %s182 = scalar_select %p181, %s23, 1
        %p183 = scmp.lt.s32.totalorder %s24, 0
        %s184 = scalar_select %p183, %s24, 0
        %s185 = sadd.s32 %s184, %s182
        %s186 = scalar_lea.vmem %s1, %s185
        %p187 = pneg %p82
        %p188 = pneg %p79
        %p189 = pneg %p108
        %p190 = pneg %p105
        %s191 = sand.u32 %s95, 1
        %s192 = scalar_lea.sflag [#allocation4], %s191
        %s193 = sand.u32 %s95, 1
        %s194 = scalar_lea.vmem [#allocation5], %s193
        %p195 = scmp.lt.s32.totalorder %s23, 1
        %s196 = scalar_select %p195, %s23, 1
        %p197 = scmp.lt.s32.totalorder %s24, 0
        %s198 = scalar_select %p197, %s24, 0
        %s199 = sadd.s32 %s198, %s196
        %s200 = scalar_lea.vmem %s1, %s199
        %p201 = scmp.eq.s32.totalorder %s24, 0
        // Predicated region
        $region33: #{tpu_custom_call.1} parent=27 // pred_check
          %p202 = pneg %p201
        $region34: #{tpu_custom_call.1} parent=27 // pred_check_branch
          %204 = sbr.rel (%p202) target = $region36
        $region35: #{tpu_custom_call.1} parent=27 // pred_region
          %vm205 = vcmask 122880
          %206 = vst.msk [vmem:[%s194] sm:$0x1] %vm205, 0.0
        $region36: #{tpu_custom_call.1} parent=27 // pred_fallthru
          _
        %v207 = vld [vmem:[%s169] sm:$0xff]
        %v208 = vld [vmem:[%s169 + $0x8] sm:$0xff]
        %v209 = vld [vmem:[%s200] sm:$0x1]
        %vm210 = vcmask 130048
        %v211 = vsel %vm210, %v207, -inf
        %v212 = vsel %vm210, %v208, -inf
        %v213 = vmax.f32 %v211, %v212
        %v214 = vrot.slane %v213, 4
        %v215 = vmax.f32 %v213, %v214
        %v216 = vrot.slane %v215, 2
        %v217 = vmax.f32 %v215, %v216
        %v218 = vrot.slane %v217, 1
        %v219 = vmax.f32 %v217, %v218
        %v220 = vsub.f32 %v207, %v219
        %v221 = vsub.f32 %v208, %v219
        %v222 = vmul.f32 %v220, 1.442695
        %v223 = vpow.pop %v222
        %v224 = vmul.f32 %v221, 1.442695
        %v225 = vpow.pop %v224
        %v226 = vsel %vm210, %v223, 0.0
        %v227 = vsel %vm210, %v225, 0.0
        %v228 = vadd.f32 %v226, %v227
        %v229 = vrot.slane %v228, 4
        %v230 = vadd.f32 %v228, %v229
        %v231 = vrot.slane %v230, 2
        %v232 = vadd.f32 %v230, %v231
        %v233 = vrot.slane %v232, 1
        %v234 = vadd.f32 %v232, %v233
        %v235 = vlog2.pop %v234
        %v236 = vmul.f32 %v235, 0.6931472
        %v237 = vadd.f32 %v219, %v236
        %v238 = vlaneseq
        %v239 = vshrl.u32 %v238, 7
        %v240 = vadd.s32 %v239, 8
        %v241 = vlaneseq
        %v242 = vshrl.u32 %v241, 7
        %v243 = vsub.s32 0, %v242
        %v244 = vrot.slane %v209, %v243
        %vm245 = vcmp.eq.s32.totalorder %v239, %v244
        %vm246 = vcmp.eq.s32.totalorder %v240, %v244
        %v247 = vsel %vm245, %v207, 0.0
        %v248 = vsel %vm246, %v208, 0.0
        %v249 = vsel %vm210, %v247, 0.0
        %v250 = vsel %vm210, %v248, 0.0
        %v251 = vadd.f32 %v249, %v250
        %v252 = vrot.slane %v251, 4
        %v253 = vadd.f32 %v251, %v252
        %v254 = vrot.slane %v253, 2
        %v255 = vadd.f32 %v253, %v254
        %v256 = vrot.slane %v255, 1
        %v257 = vadd.f32 %v255, %v256
        %v258 = vsub.f32 %v237, %v257
        %v259 = vlaneseq
        %v260 = vand.u32 %v259, 127
        %s261 = smul.u32 %s24, 16
        %v262 = vstv %s261
        %v263 = vadd.s32 %v260, %v262
        %vm264 = vcmp.lt.s32.totalorder %v263, 16
        %v265 = vsel %vm264, %v258, 0.0
        %v266 = vld [vmem:[%s194] sm:$0x1]
        %v267 = vadd.f32 %v266, %v265
        %vm268 = vcmask 122880
        %269 = vst.msk [vmem:[%s194] sm:$0x1] %vm268, %v267
        %s270 = sand.u32 %s95, 1
        %s271 = scalar_lea.sflag [#allocation4], %s270
        %s272 = sand.u32 %s95, 1
        %s273 = scalar_lea.vmem [#allocation5], %s272
        // Predicated region
        $region37: #{tpu_custom_call.1} parent=27 // pred_check
          %p274 = pneg %p105
        $region38: #{tpu_custom_call.1} parent=27 // pred_check_branch
          %276 = sbr.rel (%p274) target = $region40
        $region39: #{tpu_custom_call.1} parent=27 // pred_region
          %s278 = ssub.s32 16, 16
          %279 = vsyncadd %s271, %s278
          %s280 = smul.addr %s23, 16
          %s281 = scalar_lea.hbm %s2, %s280
          %s283 = sshll.u32 %s273, 4
          %s284 = int_to_ptr.vmem [resolvable:$true] %s283
          %286 = dma.vmem_to_hbm [thread:$0]  %s284, 16, %s281, %s271
        $region40: #{tpu_custom_call.1} parent=27 // pred_fallthru
          _
      $region28: #{tpu_custom_call.1} parent=5 // pred_fallthru
        _
      %p287 = scmp.le.s32.totalorder 2, %s14
      // Predicated region
      $region41: #{tpu_custom_call.1} parent=5 // pred_check
        %p288 = pneg %p287
      $region42: #{tpu_custom_call.1} parent=5 // pred_check_branch
        %290 = sbr.rel (%p288) target = $region44
      $region43: #{tpu_custom_call.1} parent=5 // pred_region
        %s291 = ssub.s32 %s14, 2
        // Predicated region
        $region45: #{tpu_custom_call.1} parent=43 // pred_check
          %p292 = pneg %p111
        $region46: #{tpu_custom_call.1} parent=43 // pred_check_branch
          %294 = sbr.rel (%p292) target = $region48
        $region47: #{tpu_custom_call.1} parent=43 // pred_region
          %s295 = sand.u32 %s96, 1
          %s296 = scalar_lea.sflag [#allocation4], %s295
          %s297 = sand.u32 %s96, 1
          %s298 = scalar_lea.vmem [#allocation5], %s297
          %299 = dma.done %s296, 16
        $region48: #{tpu_custom_call.1} parent=43 // pred_fallthru
          _
      $region44: #{tpu_custom_call.1} parent=5 // pred_fallthru
        _
    $region6: #{tpu_custom_call.1} parent=1 // loop_footer
      %s18 = sadd.s32 1, %s14
    $region7: #{tpu_custom_call.1} parent=1 // loop_footer_branch
      %13 = sbr.rel target = $region3
    $region8: #{tpu_custom_call.1} parent=1 // loop_exit
      _
    %300 = vsyncpa [#allocation3], 1
    %s301 = scalar_lea.sflag [#allocation3], 1
    %302 = vsyncpa %s301, 1
    %303 = vsyncpa [#allocation4], 1
    %s304 = scalar_lea.sflag [#allocation4], 1
    %305 = vsyncpa %s304, 1

</llo_original>
